<compile_context>
chip_gen: v5e
topology: v5e:2x2
jax: 0.10.0
libtpu: 0.0.40
codegen_flags: <defaults>
</compile_context>

<pallas_src>
import jax
import jax.numpy as jnp
from jax.experimental import pallas as pl
from jax.experimental.pallas import tpu as pltpu

_MiB = 1024 * 1024


# --------------------------------------------------------------------------
# Structural (constant) tree-path construction, identical to the PyTorch code
# --------------------------------------------------------------------------
def calculate_positions(max_depth, degree):
    paths = []

    def dfs_step(tree_depth, current_depth, step_direction, current_path):
        if tree_depth == current_depth:
            return
        if step_direction == 'left':
            current_path = [1] + [0] + current_path[:-2]
        elif step_direction == 'right':
            current_path = [0] + [1] + current_path[:-2]
        paths.append(current_path)
        dfs_step(tree_depth, current_depth + 1, 'left', current_path)
        dfs_step(tree_depth, current_depth + 1, 'right', current_path)

    current_path = [0 for _ in range(degree * max_depth)]
    paths.append(current_path)
    dfs_step(max_depth, 0, 'left', current_path)
    dfs_step(max_depth, 0, 'right', current_path)
    return jnp.array(paths, dtype=jnp.float32)


# --------------------------------------------------------------------------
# Pallas kernel: lane-dense broadcast add of the precomputed tree pos-enc.
#   x_ref : (br, bc)  slice of the flattened (B, N*E) token embeddings
#   pe_ref: (1,  bc)  matching slice of the flattened (1, N*E) pos encoding
# --------------------------------------------------------------------------
def add_posenc_kernel(x_ref, pe_ref, o_ref):
    o_ref[...] = x_ref[...].astype(o_ref.dtype) + pe_ref[...].astype(o_ref.dtype)


# --------------------------------------------------------------------------
# Tiling helpers
# --------------------------------------------------------------------------
def _round_up(x, m):
    return ((x + m - 1) // m) * m


def _pick_block(total, unit, cap_elems):
    """Largest block <= cap_elems that is a multiple of `unit` and evenly
    divides the (possibly zero-padded) dimension.  Returns (block, padded).
    Never exceeds cap_elems when the dim must be split -- no full-dimension
    fallback that could blow past the VMEM budget."""
    cap = max(unit, (cap_elems // unit) * unit)
    if total <= cap:
        return total, total                   # single full-extent block (legal)
    padded = _round_up(total, unit)
    blk = cap
    while blk >= unit:
        if padded % blk == 0:
            return blk, padded
        blk -= unit
    return unit, padded                        # unreachable: padded % unit == 0


# --------------------------------------------------------------------------
# Wrapper: batch-invariant weight construction + flattening + pallas_call
# --------------------------------------------------------------------------
def tree_positional_encodings(token_embedding, p, positions, *,
                              emb_size, width, depth,
                              sot_token_prepended, mode):
    dtp = emb_size // depth // width

    # ---- build_weights(): integer powers via repeated multiply (matches
    # torch.pow for integer exponents, no log/exp) -- batch-invariant ----
    tp = jnp.tanh(p.astype(jnp.float32))                       # (dtp,)
    norm = jnp.sqrt((1.0 - tp * tp) * (emb_size / 2.0))        # (dtp,)
    pows = [jnp.ones_like(tp)]
    for _ in range(1, depth):
        pows.append(pows[-1] * tp)
    pows = jnp.stack(pows, axis=0)                             # (depth, dtp)
    tree_weights = (jnp.broadcast_to(pows[:, None, :], (depth, width, dtp))
                    * norm).reshape(depth * width, dtp)        # (depth*width, dtp)

    # ---- treeify_positions() + SOT / tgt row glue (all batch-invariant) ----
    pos_enc = (positions[:, :, None] * tree_weights[None, :, :]
               ).reshape(positions.shape[0], emb_size)         # (n0, E)
    if sot_token_prepended:
        pos_enc = jnp.concatenate([pos_enc[0:1], pos_enc], axis=0)
    if mode == 'tgt':
        pos_enc = pos_enc[:-1]

    n = pos_enc.shape[0]
    B = token_embedding.shape[0]
    assert token_embedding.shape == (B, n, emb_size)

    # torch promotion semantics: bf16 embedding + f32 pos-enc -> f32 output
    out_dtype = jnp.promote_types(token_embedding.dtype, jnp.float32)
    out_bytes = int(jnp.dtype(out_dtype).itemsize)
    in_bytes = int(jnp.dtype(token_embedding.dtype).itemsize)

    # ---- generation-aware VMEM budget ----
    try:
        vmem_cap = int(pltpu.get_tpu_info().vmem_capacity_bytes)
    except Exception:
        vmem_cap = 64 * _MiB                    # conservative (v7x-sized) fallback
    if vmem_cap >= 96 * _MiB:                   # v5e / v6e: 128 MiB physical VMEM
        vmem_limit = 64 * _MiB
        block_budget = 12 * _MiB
    else:                                       # v7x: 64 MiB per TensorCore
        vmem_limit = 48 * _MiB
        block_budget = 5 * _MiB

    # ---- lane-dense flattened layout: last dim = N*E ----
    F = n * emb_size
    x2 = token_embedding.reshape(B, F)
    pe2 = pos_enc.reshape(1, F).astype(jnp.float32)

    # ---- dtype-aware tile units & block selection ----
    lane_unit = 128
    sub_unit = max(8, 32 // min(out_bytes, in_bytes))   # 8 f32 / 16 bf16 / 32 i8

    bc, F_pad = _pick_block(F, lane_unit, block_budget // (sub_unit * out_bytes))
    max_rows = max(sub_unit, block_budget // (bc * out_bytes))
    br, B_pad = _pick_block(B, sub_unit, max_rows)

    if F_pad != F:
        pe2 = jnp.pad(pe2, ((0, 0), (0, F_pad - F)))
    if (B_pad, F_pad) != (B, F):
        x2 = jnp.pad(x2, ((0, B_pad - B), (0, F_pad - F)))

    n_f = F_pad // bc
    n_b = B_pad // br

    # Grid ordering: feature-major when the feature axis is split so the PE
    # block stays VMEM-resident across the inner batch loop; batch-major when
    # n_f == 1 so the leading "parallel" axis keeps both v7x cores busy.
    if n_f >= 2:
        grid = (n_f, n_b)
        x_spec = pl.BlockSpec((br, bc), lambda j, i: (i, j))
        pe_spec = pl.BlockSpec((1, bc), lambda j, i: (0, j))
        o_spec = pl.BlockSpec((br, bc), lambda j, i: (i, j))
    else:
        grid = (n_b, n_f)
        x_spec = pl.BlockSpec((br, bc), lambda i, j: (i, j))
        pe_spec = pl.BlockSpec((1, bc), lambda i, j: (0, j))
        o_spec = pl.BlockSpec((br, bc), lambda i, j: (i, j))

    out = pl.pallas_call(
        add_posenc_kernel,
        out_shape=jax.ShapeDtypeStruct((B_pad, F_pad), out_dtype),
        grid=grid,
        in_specs=[x_spec, pe_spec],
        out_specs=o_spec,
        compiler_params=pltpu.CompilerParams(
            dimension_semantics=("parallel", "parallel"),
            vmem_limit_bytes=vmem_limit,
        ),
    )(x2, pe2)

    if (B_pad, F_pad) != (B, F):
        out = out[:B, :F]
    return out.reshape(B, n, emb_size)


# --------------------------------------------------------------------------
# Pure-JAX reference (mirrors the PyTorch module exactly)
# --------------------------------------------------------------------------
def reference_forward(token_embedding, p, positions, *,
                      emb_size, width, depth, sot_token_prepended, mode):
    dtp = emb_size // depth // width
    tree_params = jnp.tanh(p)
    tiled_tree_params = jnp.broadcast_to(
        tree_params.reshape(1, 1, -1), (depth, width, dtp))
    tiled_depths = jnp.broadcast_to(
        jnp.arange(depth, dtype=jnp.float32).reshape(-1, 1, 1), (depth, width, dtp))
    tree_norm = jnp.sqrt((1.0 - tree_params ** 2) * emb_size / 2.0)
    tree_weights = (jnp.power(tiled_tree_params, tiled_depths) * tree_norm
                    ).reshape(depth * width, dtp)
    treeified = positions[:, :, None] * tree_weights[None, :, :]
    pos_full = treeified.reshape(positions.shape[0], emb_size)
    if sot_token_prepended:
        pos_full = jnp.concatenate([pos_full[0:1], pos_full], axis=0)
    if mode == 'tgt':
        pos_full = pos_full[:-1]
    return token_embedding + pos_full[None, :, :]


if __name__ == "__main__":
    # Small, module-consistent shapes
    depth = 3
    width = 2
    d_tree_param = 4
    emb_size = depth * width * d_tree_param       # 24
    sot_token_prepended = True
    mode = "src"                                  # anything != 'tgt' keeps all rows

    positions = calculate_positions(depth, width)   # (2**(depth+1)-1, width*depth) = (15, 6)
    n_pos = positions.shape[0] + (1 if sot_token_prepended else 0)
    n_pos -= 1 if mode == "tgt" else 0               # = 16 here
    B = 2

    key = jax.random.PRNGKey(0)
    kp, kx = jax.random.split(key)
    # Parameter p ~ U(0.7, 0.999), deterministic (synthetic init, no checkpoint)
    p = jax.random.uniform(kp, (d_tree_param,), dtype=jnp.float32,
                           minval=0.7, maxval=0.999)
    token_embedding = jax.random.normal(kx, (B, n_pos, emb_size), dtype=jnp.float32)

    out = tree_positional_encodings(
        token_embedding, p, positions,
        emb_size=emb_size, width=width, depth=depth,
        sot_token_prepended=sot_token_prepended, mode=mode)
    out = jax.block_until_ready(out)

    ref = reference_forward(
        token_embedding, p, positions,
        emb_size=emb_size, width=width, depth=depth,
        sot_token_prepended=sot_token_prepended, mode=mode)

    assert out.shape == (B, n_pos, emb_size)
    assert jnp.allclose(out, ref, rtol=1e-5, atol=1e-5), "mismatch vs reference"
    print("KERNEL_OK")
</pallas_src>

<mosaic_0001>
module attributes {stable_mosaic.version = 11 : i64} {
  func.func @add_posenc_kernel(%arg0: i32, %arg1: i32, %arg2: memref<2x384xf32, #tpu.memory_space<vmem>>, %arg3: memref<1x384xf32, #tpu.memory_space<vmem>>, %arg4: memref<2x384xf32, #tpu.memory_space<vmem>>) attributes {dimension_semantics = [#tpu.dimension_semantics<parallel>, #tpu.dimension_semantics<parallel>], iteration_bounds = array<i64: 1, 1>, scalar_prefetch = 0 : i64, scratch_operands = 0 : i64, tpu.core_type = #tpu.core_type<tc>, window_params = [{transform_indices = @transform_0, window_bounds = array<i64: 2, 384>}, {transform_indices = @transform_1, window_bounds = array<i64: 1, 384>}, {transform_indices = @transform_2, window_bounds = array<i64: 2, 384>}]} {
    %c0 = arith.constant 0 : index
    %c0_0 = arith.constant 0 : index
    %0 = vector.load %arg2[%c0, %c0_0] : memref<2x384xf32, #tpu.memory_space<vmem>>, vector<2x384xf32>
    %c0_1 = arith.constant 0 : index
    %c0_2 = arith.constant 0 : index
    %1 = vector.load %arg3[%c0_1, %c0_2] : memref<1x384xf32, #tpu.memory_space<vmem>>, vector<1x384xf32>
    %2 = vector.broadcast %1 : vector<1x384xf32> to vector<2x384xf32>
    %3 = arith.addf %0, %2 : vector<2x384xf32>
    %c0_3 = arith.constant 0 : index
    %c0_4 = arith.constant 0 : index
    %4 = vector.load %arg4[%c0_3, %c0_4] : memref<2x384xf32, #tpu.memory_space<vmem>>, vector<2x384xf32>
    tpu.vector_store %arg4[%c0_3, %c0_4], %3 {strides = array<i32>} : memref<2x384xf32, #tpu.memory_space<vmem>>, vector<2x384xf32>,
    return
  }
  func.func @transform_0(%arg0: i32, %arg1: i32) -> (i32, i32) {
    %c0_i32 = arith.constant 0 : i32
    return %arg0, %arg1 : i32, i32
  }
  func.func @transform_1(%arg0: i32, %arg1: i32) -> (i32, i32) {
    %c0_i32 = arith.constant 0 : i32
    %c0_i32_0 = arith.constant 0 : i32
    return %c0_i32, %arg1 : i32, i32
  }
  func.func @transform_2(%arg0: i32, %arg1: i32) -> (i32, i32) {
    %c0_i32 = arith.constant 0 : i32
    return %arg0, %arg1 : i32, i32
  }
}

</mosaic_0001>

<llo_original>
// kernel: tpu_custom_call.1
$region0: #{tpu_custom_call.1}
  #allocation0 [shape = 'u32[]', space=smem, size = 0x4, offset = 0x4, fixed_abs, tag = 'smem constant byte address 0x4 - core index']
  #allocation1 [shape = 'u32[72,128]{1,0:T(1,128)}', space=vmem, size = 0x9000, scoped, tag = 'internal scratch']
  %s0 = inlined_call_operand.hbm [shape: f32[2,384], index: 0, kind: input, shape index: {}]
  %s1 = inlined_call_operand.hbm [shape: f32[1,384], index: 1, kind: input, shape index: {}]
  %s2 = inlined_call_operand.hbm [shape: f32[2,384], index: 2, kind: output, shape index: {}]
  %s3 = sld [smem:[#allocation0]]
  $region26: #{tpu_custom_call.1} parent=0
    _
  %s5 = ssub.s32 1, %s3
  %s6 = scalar_select 0, %s5, %s3
  $region1: #{tpu_custom_call.1} parent=0
    #allocation2 [shape = 'u8[3072]{0}', space=vmem, size = 0xc00, scoped, tag = 'input window, operand 0, single buffered']
    #allocation3 [shape = 's32[1]{0}', space=sflag, size = 0x4, scoped, tag = 'scoped memory for tpu_custom_call.1']
    #allocation4 [shape = 's32[1]{0}', space=sflag, size = 0x4, scoped, tag = 'scoped memory for tpu_custom_call.1']
    #allocation5 [shape = 'u8[1536]{0}', space=vmem, size = 0x800, scoped, tag = 'input window, operand 1, single buffered']
    #allocation6 [shape = 's32[1]{0}', space=sflag, size = 0x4, scoped, tag = 'scoped memory for tpu_custom_call.1']
    #allocation7 [shape = 'u8[3072]{0}', space=vmem, size = 0xc00, scoped, tag = 'output window, operand 0, single buffered']
    %7 = vsyncpa [#allocation3], 0
    %8 = vsyncpa [#allocation6], 0
    %9 = vsyncpa [#allocation4], 0
    // Predicated region
    $region2: #{tpu_custom_call.1} parent=1 // pred_check
      _
    $region3: #{tpu_custom_call.1} parent=1 // pred_check_branch
      %11 = sbr.rel (0) target = $region5
    $region4: #{tpu_custom_call.1} parent=1 // pred_region
      %13 = vsyncadd [#allocation3], 0
      %s15 = sshll.u32 %s0, 4
      %s16 = int_to_ptr.hbm [resolvable:$true] %s15
      %s17 = sshll.u32 [#allocation2], 4
      %s18 = int_to_ptr.vmem [resolvable:$true] %s17
      %20 = dma.hbm_to_vmem [thread:$0]  %s16, 96, %s18, [#allocation3]
    $region5: #{tpu_custom_call.1} parent=1 // pred_fallthru
      _
    // Predicated region
    $region6: #{tpu_custom_call.1} parent=1 // pred_check
      _
    $region7: #{tpu_custom_call.1} parent=1 // pred_check_branch
      %22 = sbr.rel (0) target = $region9
    $region8: #{tpu_custom_call.1} parent=1 // pred_region
      %24 = vsyncadd [#allocation6], 0
      %s26 = sshll.u32 %s1, 4
      %s27 = int_to_ptr.hbm [resolvable:$true] %s26
      %s28 = sshll.u32 [#allocation5], 4
      %s29 = int_to_ptr.vmem [resolvable:$true] %s28
      %31 = dma.hbm_to_vmem [thread:$0]  %s27, 48, %s29, [#allocation6]
    $region9: #{tpu_custom_call.1} parent=1 // pred_fallthru
      _
    // Predicated region
    $region10: #{tpu_custom_call.1} parent=1 // pred_check
      _
    $region11: #{tpu_custom_call.1} parent=1 // pred_check_branch
      %33 = sbr.rel (0) target = $region13
    $region12: #{tpu_custom_call.1} parent=1 // pred_region
      %35 = dma.done [#allocation3], 96
    $region13: #{tpu_custom_call.1} parent=1 // pred_fallthru
      _
    // Predicated region
    $region14: #{tpu_custom_call.1} parent=1 // pred_check
      _
    $region15: #{tpu_custom_call.1} parent=1 // pred_check_branch
      %37 = sbr.rel (0) target = $region17
    $region16: #{tpu_custom_call.1} parent=1 // pred_region
      %39 = dma.done [#allocation6], 48
    $region17: #{tpu_custom_call.1} parent=1 // pred_fallthru
      _
    %v40 = vld [vmem:[#allocation2] sm:$0x3f]
    %v41 = vld [vmem:[#allocation5] sm:$0x7]
    %v43 = vperm.slane %v41, 0
    %v44 = vperm.slane %v41, 1
    %v45 = vperm.slane %v41, 2
    %v46 = vrot.slane %v44, 6
    %v47 = vrot.slane %v45, 4
    %vm48 = vcmask 1041408
    %v49 = vsel %vm48, %v43, %v46
    %vm50 = vcmask 1043456
    %v51 = vsel %vm50, %v49, %v47
    %v53 = vadd.f32 %v40, %v51
    %54 = vst [vmem:[#allocation7] sm:$0x3f] %v53
    // Predicated region
    $region18: #{tpu_custom_call.1} parent=1 // pred_check
      _
    $region19: #{tpu_custom_call.1} parent=1 // pred_check_branch
      %56 = sbr.rel (0) target = $region21
    $region20: #{tpu_custom_call.1} parent=1 // pred_region
      %58 = vsyncadd [#allocation4], 0
      %s60 = sshll.u32 [#allocation7], 4
      %s61 = int_to_ptr.vmem [resolvable:$true] %s60
      %s62 = sshll.u32 %s2, 4
      %s63 = int_to_ptr.hbm [resolvable:$true] %s62
      %65 = dma.vmem_to_hbm [thread:$0]  %s61, 96, %s63, [#allocation4]
    $region21: #{tpu_custom_call.1} parent=1 // pred_fallthru
      _
    // Predicated region
    $region22: #{tpu_custom_call.1} parent=1 // pred_check
      _
    $region23: #{tpu_custom_call.1} parent=1 // pred_check_branch
      %67 = sbr.rel (0) target = $region25
    $region24: #{tpu_custom_call.1} parent=1 // pred_region
      %69 = dma.done [#allocation4], 96
    $region25: #{tpu_custom_call.1} parent=1 // pred_fallthru
      _
    %70 = vsyncpa [#allocation3], 1
    %71 = vsyncpa [#allocation6], 1
    %72 = vsyncpa [#allocation4], 1

</llo_original>
